<compile_context>
chip_gen: v5e
topology: v5e:2x2
jax: 0.10.0
libtpu: 0.0.40
codegen_flags: <defaults>
</compile_context>

<pallas_src>
from functools import partial

import jax
import jax.numpy as jnp
from jax.experimental import pallas as pl
from jax.experimental.pallas import tpu as pltpu


def _round_up(n, m):
    return ((n + m - 1) // m) * m


def _hidden_bf16_supported():
    """bf16 elementwise only on chips with a bf16 VPU (v6e / v7x)."""
    try:
        kind = jax.devices()[0].device_kind.lower()
    except Exception:
        return False
    return ("v6" in kind) or ("v7" in kind)


def _make_actor_kernel(out_dim, hidden_bf16):
    h_dt = jnp.bfloat16 if hidden_bf16 else jnp.float32

    def actor_kernel(x_ref, w1_ref, b1_ref, w2_ref, b2_ref,
                     w3_ref, b3_ref, w4_ref, b4_ref, out_ref):
        # fc1..fc3: bf16 MXU operands (fp32 internal accumulation), result and
        # bias-add/ReLU carried in h_dt (bf16 on v6e/v7x, fp32 on v5e).
        h = jnp.dot(x_ref[...], w1_ref[...], preferred_element_type=h_dt)
        h = jnp.maximum(h + b1_ref[...], 0)
        h = jnp.dot(h.astype(jnp.bfloat16), w2_ref[...],
                    preferred_element_type=h_dt)
        h = jnp.maximum(h + b2_ref[...], 0)
        h = jnp.dot(h.astype(jnp.bfloat16), w3_ref[...],
                    preferred_element_type=h_dt)
        h = jnp.maximum(h + b3_ref[...], 0)

        # fc4 (lane-dense: padded to 128 cols) + softmax(dim=-1) in fp32.
        # Pad lanes carry bias -1e30 -> exp underflows to 0, so the 128-lane
        # softmax equals the softmax over the real out_dim lanes.
        logits = jnp.dot(h.astype(jnp.bfloat16), w4_ref[...],
                         preferred_element_type=jnp.float32) + b4_ref[...]
        m = jnp.max(logits, axis=-1, keepdims=True)
        e = jnp.exp(logits - m)
        inv = pl.reciprocal(jnp.sum(e, axis=-1, keepdims=True), approx=True)
        probs = e * inv
        # Unpadded store: only the real out_dim lanes go back to HBM.
        out_ref[...] = probs[:, :out_dim]

    return actor_kernel


def prepare_params(params, out_dim, hidden_bf16):
    """One-time prep (keep OUT of the hot path): bf16 weights, padded fc4."""
    out_pad = _round_up(out_dim, 128)
    h_dt = jnp.bfloat16 if hidden_bf16 else jnp.float32
    w4p = jnp.pad(params["w4"], ((0, 0), (0, out_pad - out_dim)))
    b4p = jnp.pad(params["b4"], ((0, 0), (0, out_pad - out_dim)),
                  constant_values=-1e30)
    return {
        "w1": params["w1"].astype(jnp.bfloat16), "b1": params["b1"].astype(h_dt),
        "w2": params["w2"].astype(jnp.bfloat16), "b2": params["b2"].astype(h_dt),
        "w3": params["w3"].astype(jnp.bfloat16), "b3": params["b3"].astype(h_dt),
        "w4": w4p.astype(jnp.bfloat16),          "b4": b4p.astype(jnp.float32),
    }


@partial(jax.jit, static_argnames=("out_dim", "tb", "hidden_bf16"))
def actor_forward(x, prepared, out_dim, tb=2048, hidden_bf16=False):
    """x: (B, input_dim) float32. prepared: output of prepare_params."""
    B, in_dim = x.shape
    out_pad = prepared["w4"].shape[1]

    # Batch tile: large (default 2048 rows, ~ a few MiB of VMEM incl. double
    # buffering -> inside default scoped VMEM on v5e/v6e/v7x), but clamped to
    # ~half the batch so the grid has >= 2 steps and v7x can use both TCs.
    B8 = _round_up(B, 8)
    half = _round_up((B8 + 1) // 2, 8)
    TB = max(8, min(tb, half))
    Bp = _round_up(B, TB)

    xp = x if Bp == B else jnp.pad(x, ((0, Bp - B), (0, 0)))
    xp = xp.astype(jnp.bfloat16)          # halve the streamed-x DMA bytes

    grid = (Bp // TB,)

    in_specs = [
        # Batch-streamed activation tile.
        pl.BlockSpec((TB, in_dim), lambda i: (i, 0)),
        # Weights/biases: same block every step -> VMEM-resident.
        pl.BlockSpec(prepared["w1"].shape, lambda i: (0, 0)),
        pl.BlockSpec(prepared["b1"].shape, lambda i: (0, 0)),
        pl.BlockSpec(prepared["w2"].shape, lambda i: (0, 0)),
        pl.BlockSpec(prepared["b2"].shape, lambda i: (0, 0)),
        pl.BlockSpec(prepared["w3"].shape, lambda i: (0, 0)),
        pl.BlockSpec(prepared["b3"].shape, lambda i: (0, 0)),
        pl.BlockSpec(prepared["w4"].shape, lambda i: (0, 0)),
        pl.BlockSpec(prepared["b4"].shape, lambda i: (0, 0)),
    ]
    # Unpadded output block: last dim == full array last dim, so legal even
    # when out_dim < 128; cuts writeback bytes by up to 16x vs padded fp32.
    out_specs = pl.BlockSpec((TB, out_dim), lambda i: (i, 0))

    # Advisory cost estimate so XLA can overlap neighbors with the kernel.
    flops = 2 * Bp * (in_dim * 128 + 128 * 128 + 128 * 64 + 64 * out_pad)
    transcendentals = Bp * out_pad
    bytes_accessed = (xp.size * 2 + Bp * out_dim * 4 +
                      sum(int(v.size) * v.dtype.itemsize
                          for v in prepared.values()))

    cp_kwargs = dict(dimension_semantics=("parallel",))
    if TB >= 4096:
        # v5e's default scoped-VMEM budget (16 MiB) needs an explicit raise
        # for very large batch tiles; harmless on v6e/v7x.
        cp_kwargs["vmem_limit_bytes"] = 64 * 1024 * 1024

    out = pl.pallas_call(
        _make_actor_kernel(out_dim, hidden_bf16),
        out_shape=jax.ShapeDtypeStruct((Bp, out_dim), jnp.float32),
        grid=grid,
        in_specs=in_specs,
        out_specs=out_specs,
        compiler_params=pltpu.CompilerParams(**cp_kwargs),
        cost_estimate=pl.CostEstimate(flops=flops,
                                      transcendentals=transcendentals,
                                      bytes_accessed=bytes_accessed),
    )(xp,
      prepared["w1"], prepared["b1"],
      prepared["w2"], prepared["b2"],
      prepared["w3"], prepared["b3"],
      prepared["w4"], prepared["b4"])

    return out[:B] if Bp != B else out


def xavier_uniform(key, fan_in, fan_out):
    # matches torch.nn.init.xavier_uniform_ (gain=1.0)
    limit = jnp.sqrt(6.0 / (fan_in + fan_out))
    return jax.random.uniform(key, (fan_in, fan_out), jnp.float32,
                              minval=-limit, maxval=limit)


def init_params(key, input_dim, output_dim):
    dims = [(input_dim, 128), (128, 128), (128, 64), (64, output_dim)]
    keys = jax.random.split(key, len(dims))
    params = {}
    for i, ((fi, fo), k) in enumerate(zip(dims, keys), start=1):
        params[f"w{i}"] = xavier_uniform(k, fi, fo)
        # biases kept 2D (1, fo) for clean TPU broadcast inside the kernel
        params[f"b{i}"] = jnp.zeros((1, fo), jnp.float32)
    return params


def reference_forward(x, params, mxu_dtype=jnp.float32,
                      hidden_dtype=jnp.float32):
    """Pure-JAX reference; precision knobs mirror the kernel's numerics."""
    def hdot(a, w):
        return jnp.dot(a.astype(mxu_dtype), w.astype(mxu_dtype),
                       preferred_element_type=hidden_dtype)
    h = jnp.maximum(hdot(x, params["w1"]) + params["b1"].astype(hidden_dtype), 0)
    h = jnp.maximum(hdot(h, params["w2"]) + params["b2"].astype(hidden_dtype), 0)
    h = jnp.maximum(hdot(h, params["w3"]) + params["b3"].astype(hidden_dtype), 0)
    logits = jnp.dot(h.astype(mxu_dtype), params["w4"].astype(mxu_dtype),
                     preferred_element_type=jnp.float32) + params["b4"]
    return jax.nn.softmax(logits, axis=-1)


if __name__ == "__main__":
    key = jax.random.PRNGKey(0)
    k_param, k_x = jax.random.split(key)

    input_dim, output_dim, batch = 16, 8, 8
    hidden_bf16 = _hidden_bf16_supported()

    params = init_params(k_param, input_dim, output_dim)
    prepared = prepare_params(params, output_dim, hidden_bf16)   # once, off hot path
    x = jax.random.normal(k_x, (batch, input_dim), jnp.float32)

    out = actor_forward(x, prepared, output_dim, hidden_bf16=hidden_bf16)
    out = jax.block_until_ready(out)

    # Reference in matching precision (bf16 MXU operands; hidden dtype matches
    # what the kernel used on this chip) and a looser check vs pure fp32.
    h_dt = jnp.bfloat16 if hidden_bf16 else jnp.float32
    ref_match = reference_forward(x, params, mxu_dtype=jnp.bfloat16,
                                  hidden_dtype=h_dt)
    ref_f32 = reference_forward(x, params)

    assert out.shape == (batch, output_dim)
    assert jnp.allclose(jnp.sum(out, axis=-1), 1.0, atol=5e-3)
    assert jnp.allclose(out, ref_match, atol=5e-3, rtol=5e-3)
    assert jnp.allclose(out, ref_f32, atol=3e-2, rtol=3e-2)

    # Exercise the multi-step grid + batch-padding path (TB=16 -> 3 grid steps
    # for a padded batch of 48), still at small shapes.
    k_x2 = jax.random.split(k_x)[0]
    x2 = jax.random.normal(k_x2, (40, input_dim), jnp.float32)
    out2 = jax.block_until_ready(
        actor_forward(x2, prepared, output_dim, tb=16, hidden_bf16=hidden_bf16))
    ref2 = reference_forward(x2, params, mxu_dtype=jnp.bfloat16,
                             hidden_dtype=h_dt)
    assert out2.shape == (40, output_dim)
    assert jnp.allclose(jnp.sum(out2, axis=-1), 1.0, atol=5e-3)
    assert jnp.allclose(out2, ref2, atol=5e-3, rtol=5e-3)

    print("KERNEL_OK")
</pallas_src>

<mosaic_0001>
module attributes {stable_mosaic.version = 11 : i64} {
  func.func @actor_kernel(%arg0: i32, %arg1: memref<8x16xbf16, #tpu.memory_space<vmem>>, %arg2: memref<16x128xbf16, #tpu.memory_space<vmem>>, %arg3: memref<1x128xf32, #tpu.memory_space<vmem>>, %arg4: memref<128x128xbf16, #tpu.memory_space<vmem>>, %arg5: memref<1x128xf32, #tpu.memory_space<vmem>>, %arg6: memref<128x64xbf16, #tpu.memory_space<vmem>>, %arg7: memref<1x64xf32, #tpu.memory_space<vmem>>, %arg8: memref<64x128xbf16, #tpu.memory_space<vmem>>, %arg9: memref<1x128xf32, #tpu.memory_space<vmem>>, %arg10: memref<8x8xf32, #tpu.memory_space<vmem>>) attributes {dimension_semantics = [#tpu.dimension_semantics<parallel>], iteration_bounds = array<i64: 1>, scalar_prefetch = 0 : i64, scratch_operands = 0 : i64, tpu.core_type = #tpu.core_type<tc>, window_params = [{transform_indices = @transform_0, window_bounds = array<i64: 8, 16>}, {pipeline_mode = #tpu.pipeline_mode<synchronous>, transform_indices = @transform_1, window_bounds = array<i64: 16, 128>}, {pipeline_mode = #tpu.pipeline_mode<synchronous>, transform_indices = @transform_2, window_bounds = array<i64: 1, 128>}, {pipeline_mode = #tpu.pipeline_mode<synchronous>, transform_indices = @transform_3, window_bounds = array<i64: 128, 128>}, {pipeline_mode = #tpu.pipeline_mode<synchronous>, transform_indices = @transform_4, window_bounds = array<i64: 1, 128>}, {pipeline_mode = #tpu.pipeline_mode<synchronous>, transform_indices = @transform_5, window_bounds = array<i64: 128, 64>}, {pipeline_mode = #tpu.pipeline_mode<synchronous>, transform_indices = @transform_6, window_bounds = array<i64: 1, 64>}, {pipeline_mode = #tpu.pipeline_mode<synchronous>, transform_indices = @transform_7, window_bounds = array<i64: 64, 128>}, {pipeline_mode = #tpu.pipeline_mode<synchronous>, transform_indices = @transform_8, window_bounds = array<i64: 1, 128>}, {transform_indices = @transform_9, window_bounds = array<i64: 8, 8>}]} {
    %c0 = arith.constant 0 : index
    %c0_0 = arith.constant 0 : index
    %0 = vector.load %arg1[%c0, %c0_0] : memref<8x16xbf16, #tpu.memory_space<vmem>>, vector<8x16xbf16>
    %c0_1 = arith.constant 0 : index
    %c0_2 = arith.constant 0 : index
    %1 = vector.load %arg2[%c0_1, %c0_2] : memref<16x128xbf16, #tpu.memory_space<vmem>>, vector<16x128xbf16>
    %cst = arith.constant dense<0.000000e+00> : vector<8x128xf32>
    %2 = tpu.matmul %0, %1, %cst {dimension_numbers = #tpu.dot_dimension_numbers<[1], [0], [0], [1], [0, 0, 1, 1], [], []>} : vector<8x16xbf16>, vector<16x128xbf16>, vector<8x128xf32> -> vector<8x128xf32>
    %c0_3 = arith.constant 0 : index
    %c0_4 = arith.constant 0 : index
    %3 = vector.load %arg3[%c0_3, %c0_4] : memref<1x128xf32, #tpu.memory_space<vmem>>, vector<1x128xf32>
    %4 = vector.broadcast %3 : vector<1x128xf32> to vector<8x128xf32>
    %5 = arith.addf %2, %4 : vector<8x128xf32>
    %cst_5 = arith.constant 0.000000e+00 : f32
    %6 = vector.broadcast %cst_5 : f32 to vector<8x128xf32>
    %7 = arith.maximumf %5, %6 : vector<8x128xf32>
    %8 = arith.truncf %7 : vector<8x128xf32> to vector<8x128xbf16>
    %c0_6 = arith.constant 0 : index
    %c0_7 = arith.constant 0 : index
    %9 = vector.load %arg4[%c0_6, %c0_7] : memref<128x128xbf16, #tpu.memory_space<vmem>>, vector<128x128xbf16>
    %cst_8 = arith.constant dense<0.000000e+00> : vector<8x128xf32>
    %10 = tpu.matmul %8, %9, %cst_8 {dimension_numbers = #tpu.dot_dimension_numbers<[1], [0], [0], [1], [0, 0, 1, 1], [], []>} : vector<8x128xbf16>, vector<128x128xbf16>, vector<8x128xf32> -> vector<8x128xf32>
    %c0_9 = arith.constant 0 : index
    %c0_10 = arith.constant 0 : index
    %11 = vector.load %arg5[%c0_9, %c0_10] : memref<1x128xf32, #tpu.memory_space<vmem>>, vector<1x128xf32>
    %12 = vector.broadcast %11 : vector<1x128xf32> to vector<8x128xf32>
    %13 = arith.addf %10, %12 : vector<8x128xf32>
    %cst_11 = arith.constant 0.000000e+00 : f32
    %14 = vector.broadcast %cst_11 : f32 to vector<8x128xf32>
    %15 = arith.maximumf %13, %14 : vector<8x128xf32>
    %16 = arith.truncf %15 : vector<8x128xf32> to vector<8x128xbf16>
    %c0_12 = arith.constant 0 : index
    %c0_13 = arith.constant 0 : index
    %17 = vector.load %arg6[%c0_12, %c0_13] : memref<128x64xbf16, #tpu.memory_space<vmem>>, vector<128x64xbf16>
    %cst_14 = arith.constant dense<0.000000e+00> : vector<8x64xf32>
    %18 = tpu.matmul %16, %17, %cst_14 {dimension_numbers = #tpu.dot_dimension_numbers<[1], [0], [0], [1], [0, 0, 1, 1], [], []>} : vector<8x128xbf16>, vector<128x64xbf16>, vector<8x64xf32> -> vector<8x64xf32>
    %c0_15 = arith.constant 0 : index
    %c0_16 = arith.constant 0 : index
    %19 = vector.load %arg7[%c0_15, %c0_16] : memref<1x64xf32, #tpu.memory_space<vmem>>, vector<1x64xf32>
    %20 = vector.broadcast %19 : vector<1x64xf32> to vector<8x64xf32>
    %21 = arith.addf %18, %20 : vector<8x64xf32>
    %cst_17 = arith.constant 0.000000e+00 : f32
    %22 = vector.broadcast %cst_17 : f32 to vector<8x64xf32>
    %23 = arith.maximumf %21, %22 : vector<8x64xf32>
    %24 = arith.truncf %23 : vector<8x64xf32> to vector<8x64xbf16>
    %c0_18 = arith.constant 0 : index
    %c0_19 = arith.constant 0 : index
    %25 = vector.load %arg8[%c0_18, %c0_19] : memref<64x128xbf16, #tpu.memory_space<vmem>>, vector<64x128xbf16>
    %cst_20 = arith.constant dense<0.000000e+00> : vector<8x128xf32>
    %26 = tpu.matmul %24, %25, %cst_20 {dimension_numbers = #tpu.dot_dimension_numbers<[1], [0], [0], [1], [0, 0, 1, 1], [], []>} : vector<8x64xbf16>, vector<64x128xbf16>, vector<8x128xf32> -> vector<8x128xf32>
    %c0_21 = arith.constant 0 : index
    %c0_22 = arith.constant 0 : index
    %27 = vector.load %arg9[%c0_21, %c0_22] : memref<1x128xf32, #tpu.memory_space<vmem>>, vector<1x128xf32>
    %28 = vector.broadcast %27 : vector<1x128xf32> to vector<8x128xf32>
    %29 = arith.addf %26, %28 : vector<8x128xf32>
    %cst_23 = arith.constant dense<0xFF800000> : vector<8xf32>
    %30 = vector.multi_reduction <maximumf>, %29, %cst_23 [1] : vector<8x128xf32> to vector<8xf32>
    %31 = vector.shape_cast %30 : vector<8xf32> to vector<8x1xf32>
    %32 = vector.broadcast %31 : vector<8x1xf32> to vector<8x128xf32>
    %33 = arith.subf %29, %32 : vector<8x128xf32>
    %34 = math.exp %33 : vector<8x128xf32>
    %cst_24 = arith.constant dense<0.000000e+00> : vector<8xf32>
    %35 = vector.multi_reduction <add>, %34, %cst_24 [1] : vector<8x128xf32> to vector<8xf32>
    %36 = vector.shape_cast %35 : vector<8xf32> to vector<8x1xf32>
    %37 = tpu.reciprocal %36 {approx = true} : vector<8x1xf32> -> vector<8x1xf32>
    %38 = vector.broadcast %37 : vector<8x1xf32> to vector<8x128xf32>
    %39 = arith.mulf %34, %38 : vector<8x128xf32>
    %40 = vector.extract_strided_slice %39 {offsets = [0, 0], sizes = [8, 8], strides = [1, 1]} : vector<8x128xf32> to vector<8x8xf32>
    %c0_25 = arith.constant 0 : index
    %c0_26 = arith.constant 0 : index
    %41 = vector.load %arg10[%c0_25, %c0_26] : memref<8x8xf32, #tpu.memory_space<vmem>>, vector<8x8xf32>
    tpu.vector_store %arg10[%c0_25, %c0_26], %40 {strides = array<i32>} : memref<8x8xf32, #tpu.memory_space<vmem>>, vector<8x8xf32>,
    return
  }
  func.func @transform_0(%arg0: i32) -> (i32, i32) {
    %c0_i32 = arith.constant 0 : i32
    %c0_i32_0 = arith.constant 0 : i32
    return %arg0, %c0_i32 : i32, i32
  }
  func.func @transform_1(%arg0: i32) -> (i32, i32) {
    %c0_i32 = arith.constant 0 : i32
    %c0_i32_0 = arith.constant 0 : i32
    %c0_i32_1 = arith.constant 0 : i32
    return %c0_i32, %c0_i32_0 : i32, i32
  }
  func.func @transform_2(%arg0: i32) -> (i32, i32) {
    %c0_i32 = arith.constant 0 : i32
    %c0_i32_0 = arith.constant 0 : i32
    %c0_i32_1 = arith.constant 0 : i32
    return %c0_i32, %c0_i32_0 : i32, i32
  }
  func.func @transform_3(%arg0: i32) -> (i32, i32) {
    %c0_i32 = arith.constant 0 : i32
    %c0_i32_0 = arith.constant 0 : i32
    %c0_i32_1 = arith.constant 0 : i32
    return %c0_i32, %c0_i32_0 : i32, i32
  }
  func.func @transform_4(%arg0: i32) -> (i32, i32) {
    %c0_i32 = arith.constant 0 : i32
    %c0_i32_0 = arith.constant 0 : i32
    %c0_i32_1 = arith.constant 0 : i32
    return %c0_i32, %c0_i32_0 : i32, i32
  }
  func.func @transform_5(%arg0: i32) -> (i32, i32) {
    %c0_i32 = arith.constant 0 : i32
    %c0_i32_0 = arith.constant 0 : i32
    %c0_i32_1 = arith.constant 0 : i32
    return %c0_i32, %c0_i32_0 : i32, i32
  }
  func.func @transform_6(%arg0: i32) -> (i32, i32) {
    %c0_i32 = arith.constant 0 : i32
    %c0_i32_0 = arith.constant 0 : i32
    %c0_i32_1 = arith.constant 0 : i32
    return %c0_i32, %c0_i32_0 : i32, i32
  }
  func.func @transform_7(%arg0: i32) -> (i32, i32) {
    %c0_i32 = arith.constant 0 : i32
    %c0_i32_0 = arith.constant 0 : i32
    %c0_i32_1 = arith.constant 0 : i32
    return %c0_i32, %c0_i32_0 : i32, i32
  }
  func.func @transform_8(%arg0: i32) -> (i32, i32) {
    %c0_i32 = arith.constant 0 : i32
    %c0_i32_0 = arith.constant 0 : i32
    %c0_i32_1 = arith.constant 0 : i32
    return %c0_i32, %c0_i32_0 : i32, i32
  }
  func.func @transform_9(%arg0: i32) -> (i32, i32) {
    %c0_i32 = arith.constant 0 : i32
    %c0_i32_0 = arith.constant 0 : i32
    return %arg0, %c0_i32 : i32, i32
  }
}

</mosaic_0001>

<llo_original>
// kernel: actor_forward.1
$region0: #{actor_forward.1}
  #allocation0 [shape = 'u32[]', space=smem, size = 0x4, offset = 0x4, fixed_abs, tag = 'smem constant byte address 0x4 - core index']
  #allocation1 [shape = 'u32[72,128]{1,0:T(1,128)}', space=vmem, size = 0x9000, scoped, tag = 'internal scratch']
  %s0 = inlined_call_operand.vmem [shape: bf16[8,16], index: 0, kind: input, shape index: {}]
  %s1 = inlined_call_operand.vmem [shape: bf16[16,128], index: 1, kind: input, shape index: {}]
  %s2 = inlined_call_operand.vmem [shape: f32[1,128], index: 2, kind: input, shape index: {}]
  %s3 = inlined_call_operand.vmem [shape: bf16[128,128], index: 3, kind: input, shape index: {}]
  %s4 = inlined_call_operand.vmem [shape: f32[1,128], index: 4, kind: input, shape index: {}]
  %s5 = inlined_call_operand.vmem [shape: bf16[128,64], index: 5, kind: input, shape index: {}]
  %s6 = inlined_call_operand.vmem [shape: f32[1,64], index: 6, kind: input, shape index: {}]
  %s7 = inlined_call_operand.vmem [shape: bf16[64,128], index: 7, kind: input, shape index: {}]
  %s8 = inlined_call_operand.vmem [shape: f32[1,128], index: 8, kind: input, shape index: {}]
  %s9 = inlined_call_operand.hbm [shape: f32[8,8], index: 9, kind: output, shape index: {}]
  %s10 = sld [smem:[#allocation0]]
  $region46: #{actor_forward.1} parent=0
    _
  %s12 = ssub.s32 1, %s10
  %s13 = scalar_select 0, %s12, %s10
  $region1: #{actor_forward.1} parent=0
    #allocation2 [shape = 'u8[4096]{0}', space=vmem, size = 0x1000, scoped, tag = 'output window, operand 0, single buffered']
    #allocation3 [shape = 's32[1]{0}', space=sflag, size = 0x4, scoped, tag = 'scoped memory for actor_forward.1']
    %14 = vsyncpa [#allocation3], 0
    // Predicated region
    $region2: #{actor_forward.1} parent=1 // pred_check
      _
    $region3: #{actor_forward.1} parent=1 // pred_check_branch
      %16 = sbr.rel (0) target = $region5
    $region4: #{actor_forward.1} parent=1 // pred_region
      _
    $region5: #{actor_forward.1} parent=1 // pred_fallthru
      _
    // Predicated region
    $region6: #{actor_forward.1} parent=1 // pred_check
      _
    $region7: #{actor_forward.1} parent=1 // pred_check_branch
      %18 = sbr.rel (0) target = $region9
    $region8: #{actor_forward.1} parent=1 // pred_region
      _
    $region9: #{actor_forward.1} parent=1 // pred_fallthru
      _
    // Predicated region
    $region10: #{actor_forward.1} parent=1 // pred_check
      _
    $region11: #{actor_forward.1} parent=1 // pred_check_branch
      %20 = sbr.rel (0) target = $region13
    $region12: #{actor_forward.1} parent=1 // pred_region
      _
    $region13: #{actor_forward.1} parent=1 // pred_fallthru
      _
    // Predicated region
    $region14: #{actor_forward.1} parent=1 // pred_check
      _
    $region15: #{actor_forward.1} parent=1 // pred_check_branch
      %22 = sbr.rel (0) target = $region17
    $region16: #{actor_forward.1} parent=1 // pred_region
      _
    $region17: #{actor_forward.1} parent=1 // pred_fallthru
      _
    // Predicated region
    $region18: #{actor_forward.1} parent=1 // pred_check
      _
    $region19: #{actor_forward.1} parent=1 // pred_check_branch
      %24 = sbr.rel (0) target = $region21
    $region20: #{actor_forward.1} parent=1 // pred_region
      _
    $region21: #{actor_forward.1} parent=1 // pred_fallthru
      _
    // Predicated region
    $region22: #{actor_forward.1} parent=1 // pred_check
      _
    $region23: #{actor_forward.1} parent=1 // pred_check_branch
      %26 = sbr.rel (0) target = $region25
    $region24: #{actor_forward.1} parent=1 // pred_region
      _
    $region25: #{actor_forward.1} parent=1 // pred_fallthru
      _
    // Predicated region
    $region26: #{actor_forward.1} parent=1 // pred_check
      _
    $region27: #{actor_forward.1} parent=1 // pred_check_branch
      %28 = sbr.rel (0) target = $region29
    $region28: #{actor_forward.1} parent=1 // pred_region
      _
    $region29: #{actor_forward.1} parent=1 // pred_fallthru
      _
    // Predicated region
    $region30: #{actor_forward.1} parent=1 // pred_check
      _
    $region31: #{actor_forward.1} parent=1 // pred_check_branch
      %30 = sbr.rel (0) target = $region33
    $region32: #{actor_forward.1} parent=1 // pred_region
      _
    $region33: #{actor_forward.1} parent=1 // pred_fallthru
      _
    // Predicated region
    $region34: #{actor_forward.1} parent=1 // pred_check
      _
    $region35: #{actor_forward.1} parent=1 // pred_check_branch
      %32 = sbr.rel (0) target = $region37
    $region36: #{actor_forward.1} parent=1 // pred_region
      _
    $region37: #{actor_forward.1} parent=1 // pred_fallthru
      _
    %v34 = vld [vmem:[%s0] sm:$0xf]
    %v35 = vld [vmem:[%s1] sm:$0xf]
    %v36 = vld [vmem:[%s1 + $0x4] sm:$0xf]
    %v37 = vld [vmem:[%s2] sm:$0x1]
    %v39 = vperm.slane %v37, 0
    %v43 = vunpack.c.l.b16 %v35
    %v44 = vunpack.c.l.b16 %v36
    %v45 = vpack.c.b16 %v44, %v43
    %vm47 = vcmask 130048
    %v49 = vsel %vm47, %v34, 0
    %51 = vmatpush.bf16.msra.mxu0 0
    %52 = vmatpush.bf16.msra.mxu0 0
    %53 = vmatpush.bf16.msra.mxu0 0
    %54 = vmatpush.bf16.msra.mxu0 0
    %55 = vmatpush.bf16.msra.mxu0 0
    %56 = vmatpush.bf16.msra.mxu0 0
    %57 = vmatpush.bf16.msra.mxu0 0
    %58 = vmatpush.bf16.msra.mxu0 %v45
    %59 = vmatmul.bf16.gmra.mxu0 %v49
    %v60 = vpop.f32.mrf.mxu0
    %v61 = vadd.f32 %v39, %v60
    %v62 = vpop.f32.mrf.mxu0
    %63 = vdwg.mxu0
    %v64 = vmax.f32 %v61, 0.0
    %v65 = vpack.c.bf16 %v64, %v64
    %v66 = vld [vmem:[%s3] sm:$0xf]
    %v67 = vld [vmem:[%s3 + $0x4] sm:$0xf]
    %v68 = vld [vmem:[%s3 + $0x8] sm:$0xf]
    %v69 = vld [vmem:[%s3 + $0xc] sm:$0xf]
    %v70 = vld [vmem:[%s3 + $0x10] sm:$0xf]
    %v71 = vld [vmem:[%s3 + $0x14] sm:$0xf]
    %v72 = vld [vmem:[%s3 + $0x18] sm:$0xf]
    %v73 = vld [vmem:[%s3 + $0x1c] sm:$0xf]
    %v74 = vld [vmem:[%s3 + $0x20] sm:$0xf]
    %v75 = vld [vmem:[%s3 + $0x24] sm:$0xf]
    %v76 = vld [vmem:[%s3 + $0x28] sm:$0xf]
    %v77 = vld [vmem:[%s3 + $0x2c] sm:$0xf]
    %v78 = vld [vmem:[%s3 + $0x30] sm:$0xf]
    %v79 = vld [vmem:[%s3 + $0x34] sm:$0xf]
    %v80 = vld [vmem:[%s3 + $0x38] sm:$0xf]
    %v81 = vld [vmem:[%s3 + $0x3c] sm:$0xf]
    %v82 = vld [vmem:[%s4] sm:$0x1]
    %v84 = vperm.slane %v82, 0
    %v102 = vunpack.c.l.b16 %v66
    %v103 = vunpack.c.l.b16 %v67
    %v104 = vunpack.c.l.b16 %v68
    %v105 = vunpack.c.l.b16 %v69
    %v106 = vunpack.c.l.b16 %v70
    %v107 = vunpack.c.l.b16 %v71
    %v108 = vunpack.c.l.b16 %v72
    %v109 = vunpack.c.l.b16 %v73
    %v110 = vunpack.c.l.b16 %v74
    %v111 = vunpack.c.l.b16 %v75
    %v112 = vunpack.c.l.b16 %v76
    %v113 = vunpack.c.l.b16 %v77
    %v114 = vunpack.c.l.b16 %v78
    %v115 = vunpack.c.l.b16 %v79
    %v116 = vunpack.c.l.b16 %v80
    %v117 = vunpack.c.l.b16 %v81
    %v118 = vpack.c.b16 %v103, %v102
    %v119 = vpack.c.b16 %v105, %v104
    %v120 = vpack.c.b16 %v107, %v106
    %v121 = vpack.c.b16 %v109, %v108
    %v122 = vpack.c.b16 %v111, %v110
    %v123 = vpack.c.b16 %v113, %v112
    %v124 = vpack.c.b16 %v115, %v114
    %v125 = vpack.c.b16 %v117, %v116
    %134 = vmatpush.bf16.msra.mxu0 %v125
    %135 = vmatpush.bf16.msra.mxu0 %v124
    %136 = vmatpush.bf16.msra.mxu0 %v123
    %137 = vmatpush.bf16.msra.mxu0 %v122
    %138 = vmatpush.bf16.msra.mxu0 %v121
    %139 = vmatpush.bf16.msra.mxu0 %v120
    %140 = vmatpush.bf16.msra.mxu0 %v119
    %141 = vmatpush.bf16.msra.mxu0 %v118
    %142 = vmatmul.bf16.gmra.mxu0 %v65
    %v143 = vpop.f32.mrf.mxu0
    %v144 = vadd.f32 %v84, %v143
    %v145 = vpop.f32.mrf.mxu0
    %146 = vdwg.mxu0
    %v147 = vmax.f32 %v144, 0.0
    %v148 = vpack.c.bf16 %v147, %v147
    %v149 = vld [vmem:[%s5] sm:$0xf]
    %v150 = vld [vmem:[%s5 + $0x4] sm:$0xf]
    %v151 = vld [vmem:[%s5 + $0x8] sm:$0xf]
    %v152 = vld [vmem:[%s5 + $0xc] sm:$0xf]
    %v153 = vld [vmem:[%s5 + $0x10] sm:$0xf]
    %v154 = vld [vmem:[%s5 + $0x14] sm:$0xf]
    %v155 = vld [vmem:[%s5 + $0x18] sm:$0xf]
    %v156 = vld [vmem:[%s5 + $0x1c] sm:$0xf]
    %v157 = vld [vmem:[%s5 + $0x20] sm:$0xf]
    %v158 = vld [vmem:[%s5 + $0x24] sm:$0xf]
    %v159 = vld [vmem:[%s5 + $0x28] sm:$0xf]
    %v160 = vld [vmem:[%s5 + $0x2c] sm:$0xf]
    %v161 = vld [vmem:[%s5 + $0x30] sm:$0xf]
    %v162 = vld [vmem:[%s5 + $0x34] sm:$0xf]
    %v163 = vld [vmem:[%s5 + $0x38] sm:$0xf]
    %v164 = vld [vmem:[%s5 + $0x3c] sm:$0xf]
    %v165 = vld [vmem:[%s6] sm:$0x1]
    %v167 = vperm.slane %v165, 0
    %v185 = vunpack.c.l.b16 %v149
    %v186 = vunpack.c.l.b16 %v150
    %v187 = vunpack.c.l.b16 %v151
    %v188 = vunpack.c.l.b16 %v152
    %v189 = vunpack.c.l.b16 %v153
    %v190 = vunpack.c.l.b16 %v154
    %v191 = vunpack.c.l.b16 %v155
    %v192 = vunpack.c.l.b16 %v156
    %v193 = vunpack.c.l.b16 %v157
    %v194 = vunpack.c.l.b16 %v158
    %v195 = vunpack.c.l.b16 %v159
    %v196 = vunpack.c.l.b16 %v160
    %v197 = vunpack.c.l.b16 %v161
    %v198 = vunpack.c.l.b16 %v162
    %v199 = vunpack.c.l.b16 %v163
    %v200 = vunpack.c.l.b16 %v164
    %v201 = vpack.c.b16 %v186, %v185
    %v202 = vpack.c.b16 %v188, %v187
    %v203 = vpack.c.b16 %v190, %v189
    %v204 = vpack.c.b16 %v192, %v191
    %v205 = vpack.c.b16 %v194, %v193
    %v206 = vpack.c.b16 %v196, %v195
    %v207 = vpack.c.b16 %v198, %v197
    %v208 = vpack.c.b16 %v200, %v199
    %217 = vmatpush.bf16.msra.mxu0 %v208
    %218 = vmatpush.bf16.msra.mxu0 %v207
    %219 = vmatpush.bf16.msra.mxu0 %v206
    %220 = vmatpush.bf16.msra.mxu0 %v205
    %221 = vmatpush.bf16.msra.mxu0 %v204
    %222 = vmatpush.bf16.msra.mxu0 %v203
    %223 = vmatpush.bf16.msra.mxu0 %v202
    %224 = vmatpush.bf16.msra.mxu0 %v201
    %225 = vmatmul.bf16.gmra.mxu0 %v148
    %v226 = vpop.f32.mrf.mxu0
    %v227 = vadd.f32 %v167, %v226
    %v228 = vpop.f32.mrf.mxu0
    %229 = vdwg.mxu0
    %v230 = vmax.f32 %v227, 0.0
    %v231 = vpack.c.bf16 %v230, %v230
    %v232 = vld [vmem:[%s7] sm:$0xf]
    %v233 = vld [vmem:[%s7 + $0x4] sm:$0xf]
    %v234 = vld [vmem:[%s7 + $0x8] sm:$0xf]
    %v235 = vld [vmem:[%s7 + $0xc] sm:$0xf]
    %v236 = vld [vmem:[%s7 + $0x10] sm:$0xf]
    %v237 = vld [vmem:[%s7 + $0x14] sm:$0xf]
    %v238 = vld [vmem:[%s7 + $0x18] sm:$0xf]
    %v239 = vld [vmem:[%s7 + $0x1c] sm:$0xf]
    %v240 = vld [vmem:[%s8] sm:$0x1]
    %v242 = vperm.slane %v240, 0
    %v252 = vunpack.c.l.b16 %v232
    %v253 = vunpack.c.l.b16 %v233
    %v254 = vunpack.c.l.b16 %v234
    %v255 = vunpack.c.l.b16 %v235
    %v256 = vunpack.c.l.b16 %v236
    %v257 = vunpack.c.l.b16 %v237
    %v258 = vunpack.c.l.b16 %v238
    %v259 = vunpack.c.l.b16 %v239
    %v260 = vpack.c.b16 %v253, %v252
    %v261 = vpack.c.b16 %v255, %v254
    %v262 = vpack.c.b16 %v257, %v256
    %v263 = vpack.c.b16 %v259, %v258
    %vm268 = vcmask 523264
    %v270 = vsel %vm268, %v231, 0
    %272 = vmatpush.bf16.msra.mxu0 0
    %273 = vmatpush.bf16.msra.mxu0 0
    %274 = vmatpush.bf16.msra.mxu0 0
    %275 = vmatpush.bf16.msra.mxu0 0
    %276 = vmatpush.bf16.msra.mxu0 %v263
    %277 = vmatpush.bf16.msra.mxu0 %v262
    %278 = vmatpush.bf16.msra.mxu0 %v261
    %279 = vmatpush.bf16.msra.mxu0 %v260
    %280 = vmatmul.bf16.gmra.mxu0 %v270
    %v281 = vpop.f32.mrf.mxu0
    %v282 = vadd.f32 %v242, %v281
    %v283 = vpop.f32.mrf.mxu0
    %284 = vdwg.mxu0
    %285 = vmax.xlane.f32.xlu0 %v282
    %v286 = vpop.xlane.xlu0 %285
    %v287 = vsub.f32 %v282, %v286
    %v288 = vmul.f32 %v287, 1.442695
    %v289 = vpow.pop %v288
    %290 = vadd.xlane.f32.xlu0 %v289
    %v291 = vpop.xlane.xlu0 %290
    %v292 = vrcp.pop %v291
    %v293 = vmul.f32 %v289, %v292
    %vm294 = vcmask 64512
    %295 = vst.msk [vmem:[#allocation2] sm:$0xff] %vm294, %v293
    // Predicated region
    $region38: #{actor_forward.1} parent=1 // pred_check
      _
    $region39: #{actor_forward.1} parent=1 // pred_check_branch
      %297 = sbr.rel (0) target = $region41
    $region40: #{actor_forward.1} parent=1 // pred_region
      %299 = vsyncadd [#allocation3], 0
      %s301 = sshll.u32 [#allocation2], 4
      %s302 = int_to_ptr.vmem [resolvable:$true] %s301
      %s303 = sshll.u32 %s9, 4
      %s304 = int_to_ptr.hbm [resolvable:$true] %s303
      %306 = dma.vmem_to_hbm [thread:$0]  %s302, 128, %s304, [#allocation3]
    $region41: #{actor_forward.1} parent=1 // pred_fallthru
      _
    // Predicated region
    $region42: #{actor_forward.1} parent=1 // pred_check
      _
    $region43: #{actor_forward.1} parent=1 // pred_check_branch
      %308 = sbr.rel (0) target = $region45
    $region44: #{actor_forward.1} parent=1 // pred_region
      %310 = dma.done [#allocation3], 128
    $region45: #{actor_forward.1} parent=1 // pred_fallthru
      _
    %311 = vsyncpa [#allocation3], 1

</llo_original>
